<compile_context>
chip_gen: v7x
topology: tpu7x:2x2x1
jax: 0.10.0
libtpu: 0.0.40
codegen_flags: <defaults>
</compile_context>

<pallas_src>
import functools

import numpy as np
import jax
import jax.numpy as jnp
from jax.experimental import pallas as pl
from jax.experimental.pallas import tpu as pltpu


# pywt reconstruction filters (rec_lo, rec_hi), hard-coded so the script is
# fully self-contained (no pywt dependency).
# TODO(synk): extend this table if other pywt wavelets are needed.
_WAVELETS = {
    "haar": (
        [0.7071067811865476, 0.7071067811865476],
        [0.7071067811865476, -0.7071067811865476],
    ),
    "db2": (
        [0.48296291314469025, 0.836516303737469,
         0.22414386804185735, -0.12940952255092145],
        [-0.12940952255092145, -0.22414386804185735,
         0.836516303737469, -0.48296291314469025],
    ),
}

_VMEM_BLOCK_BUDGET = 20 * 1024 * 1024   # per-step working-set budget (bytes)
_VMEM_LIMIT_BYTES = 32 * 1024 * 1024    # raise v5e's 16 MiB scoped default


def build_dwt_matrices(h, wavelet="haar"):
    """Host-side replica of DWT.gene_matrix: returns (M_L, M_H), each (h//2, h)."""
    rec_lo, rec_hi = _WAVELETS[wavelet]
    band_length = len(rec_lo)
    half_band = band_length // 2
    half_edge = h // 2

    matrix_h = np.zeros((half_edge, h + band_length - 2), np.float32)
    matrix_g = np.zeros((half_edge, h + band_length - 2), np.float32)
    index = 0
    for i in range(half_edge):
        matrix_h[i, index:index + band_length] = rec_lo
        matrix_g[i, index:index + band_length] = rec_hi
        index += 2
    end = None if half_band == 1 else -half_band + 1
    matrix_h = matrix_h[:, half_band - 1:end]
    matrix_g = matrix_g[:, half_band - 1:end]
    return matrix_h, matrix_g


def dwt_kernel(x_ref, m_ref, mt_ref, ll_ref, lh_ref, hl_ref, hh_ref):
    """x_ref: (NB, S, S) images; m_ref = [M_L; M_H] (S, S); mt_ref = m^T.

    Computes Z_b = M @ x_b @ M^T for all NB images and writes the four
    quadrants (LL, LH, HL, HH) to the four output refs.
    """
    nb, s, _ = x_ref.shape
    sh = s // 2
    x = x_ref[...]

    # Width (last-axis) transform, batch-folded over flattened rows:
    # one (NB*S, S) @ (S, S) MXU matmul, f32 accumulation.
    a = jnp.dot(x.reshape(nb * s, s), mt_ref[...],
                preferred_element_type=jnp.float32)
    a = a.reshape(nb, s, s).astype(x.dtype)

    # Height transform: a single batched matmul (no per-image unroll).
    m_b = jnp.broadcast_to(m_ref[...], (nb, s, s))
    z = jnp.einsum("bik,bkw->biw", m_b, a,
                   preferred_element_type=jnp.float32)

    # Quadrant split in VMEM -> four direct outputs, no wrapper HBM pass.
    ll_ref[...] = z[:, :sh, :sh].astype(ll_ref.dtype)
    lh_ref[...] = z[:, :sh, sh:].astype(lh_ref.dtype)
    hl_ref[...] = z[:, sh:, :sh].astype(hl_ref.dtype)
    hh_ref[...] = z[:, sh:, sh:].astype(hh_ref.dtype)


def _pick_block(nc, s, itemsize, override=None):
    """Choose (NB, grid, pad) so the per-step VMEM working set fits the budget.

    Working set per image ~ S^2 * (2*in + 2*out double-buffered blocks
    + f32 intermediates a,z + broadcast M) = S^2 * (6*itemsize + 8) bytes.
    """
    per_image = s * s * (6 * itemsize + 8)
    cap = max(1, _VMEM_BLOCK_BUDGET // per_image)
    if override is not None:
        cap = max(1, min(cap, int(override)))
    cap_eff = min(cap, nc)

    nb = max(d for d in range(1, cap_eff + 1) if nc % d == 0)
    if nb * 2 <= cap_eff:
        # Degenerate divisor structure (e.g. prime NC >> cap): pad the tail
        # instead of running with tiny, overhead-dominated blocks.
        nb = cap_eff
        g = -(-nc // nb)
        return nb, g, g * nb - nc
    return nb, nc // nb, 0


@functools.partial(jax.jit, static_argnames=("wavelet", "max_images_per_block"))
def dwt_forward(x_nchw, wavelet="haar", max_images_per_block=None):
    """LL, LH, HL, HH = dwt_forward(x) for x of shape (N, C, H, W), H == W."""
    n, c, h, w = x_nchw.shape
    if h != w:
        # The reference builds its matrices from H only and applies them on
        # both axes, which requires square feature maps.
        raise ValueError("DWT reference requires H == W")
    if h % 2:
        raise ValueError("DWT requires an even spatial size")

    io_dtype = x_nchw.dtype
    s = h
    sh = s // 2

    m_l, m_h = build_dwt_matrices(s, wavelet)
    m_np = np.concatenate([m_l, m_h], axis=0).astype(np.float32)      # (S, S)
    m = jnp.asarray(m_np, dtype=io_dtype)
    mt = jnp.asarray(np.ascontiguousarray(m_np.T), dtype=io_dtype)    # (S, S)

    nc = n * c
    itemsize = jnp.dtype(io_dtype).itemsize
    nb, g, pad = _pick_block(nc, s, itemsize, max_images_per_block)

    x = x_nchw.reshape(nc, s, s)                 # free reshape, caller dtype
    if pad:
        x = jnp.concatenate([x, jnp.zeros((pad, s, s), io_dtype)], axis=0)
    nc_p = nc + pad

    band_shape = jax.ShapeDtypeStruct((nc_p, sh, sh), io_dtype)
    band_spec = pl.BlockSpec((nb, sh, sh), lambda i: (i, 0, 0))

    ll, lh, hl, hh = pl.pallas_call(
        dwt_kernel,
        out_shape=(band_shape, band_shape, band_shape, band_shape),
        grid=(g,),
        in_specs=[
            pl.BlockSpec((nb, s, s), lambda i: (i, 0, 0)),   # NB images
            pl.BlockSpec((s, s), lambda i: (0, 0)),          # M = [M_L; M_H]
            pl.BlockSpec((s, s), lambda i: (0, 0)),          # M^T
        ],
        out_specs=(band_spec, band_spec, band_spec, band_spec),
        compiler_params=pltpu.CompilerParams(
            dimension_semantics=("parallel",),
            vmem_limit_bytes=_VMEM_LIMIT_BYTES,
        ),
    )(x, m, mt)

    def _finish(band):
        return band[:nc].reshape(n, c, sh, sh)

    return _finish(ll), _finish(lh), _finish(hl), _finish(hh)


def dwt_reference(x, wavelet="haar"):
    """Pure-JAX (f32) replica of the PyTorch forward (correctness check)."""
    _, _, h, _ = x.shape
    m_l, m_h = build_dwt_matrices(h, wavelet)
    ml = jnp.asarray(m_l)
    mh = jnp.asarray(m_h)
    xf = x.astype(jnp.float32)
    lo = jnp.einsum("ih,nchw->nciw", ml, xf)
    hi = jnp.einsum("ih,nchw->nciw", mh, xf)
    ll = jnp.einsum("nciw,jw->ncij", lo, ml)
    lh = jnp.einsum("nciw,jw->ncij", lo, mh)
    hl = jnp.einsum("nciw,jw->ncij", hi, ml)
    hh = jnp.einsum("nciw,jw->ncij", hi, mh)
    return ll, lh, hl, hh


def _check(outs, refs, atol, rtol):
    for got, ref in zip(outs, refs):
        assert got.shape == ref.shape, (got.shape, ref.shape)
        gotf = got.astype(jnp.float32)
        assert bool(jnp.all(jnp.isfinite(gotf)))
        assert bool(jnp.allclose(gotf, ref, atol=atol, rtol=rtol)), (
            float(jnp.max(jnp.abs(gotf - ref))))


if __name__ == "__main__":
    key = jax.random.PRNGKey(0)
    N, C, H, W = 2, 4, 16, 16
    x = jax.random.normal(key, (N, C, H, W), jnp.float32)

    # 1) float32, haar
    outs = jax.block_until_ready(dwt_forward(x, wavelet="haar"))
    _check(outs, dwt_reference(x, "haar"), atol=1e-3, rtol=1e-3)

    # 2) float32, db2
    outs = jax.block_until_ready(dwt_forward(x, wavelet="db2"))
    _check(outs, dwt_reference(x, "db2"), atol=1e-3, rtol=1e-3)

    # 3) bfloat16 I/O (halved HBM traffic), f32 accumulation, loose tolerance
    xb = x.astype(jnp.bfloat16)
    outs = jax.block_until_ready(dwt_forward(xb, wavelet="haar"))
    _check(outs, dwt_reference(xb.astype(jnp.float32), "haar"),
           atol=1e-1, rtol=1e-1)

    # 4) ragged batch (prime N*C) with a small block override: padded-tail path
    x7 = jax.random.normal(jax.random.PRNGKey(1), (1, 7, 16, 16), jnp.float32)
    outs = jax.block_until_ready(
        dwt_forward(x7, wavelet="haar", max_images_per_block=4))
    _check(outs, dwt_reference(x7, "haar"), atol=1e-3, rtol=1e-3)

    print("KERNEL_OK")
</pallas_src>

<mosaic_0001>
module attributes {stable_mosaic.version = 11 : i64} {
  func.func @dwt_kernel(%arg0: i32, %arg1: memref<8x16x16xf32, #tpu.memory_space<vmem>>, %arg2: memref<16x16xf32, #tpu.memory_space<vmem>>, %arg3: memref<16x16xf32, #tpu.memory_space<vmem>>, %arg4: memref<8x8x8xf32, #tpu.memory_space<vmem>>, %arg5: memref<8x8x8xf32, #tpu.memory_space<vmem>>, %arg6: memref<8x8x8xf32, #tpu.memory_space<vmem>>, %arg7: memref<8x8x8xf32, #tpu.memory_space<vmem>>) attributes {dimension_semantics = [#tpu.dimension_semantics<parallel>], iteration_bounds = array<i64: 1>, scalar_prefetch = 0 : i64, scratch_operands = 0 : i64, tpu.core_type = #tpu.core_type<tc>, window_params = [{transform_indices = @transform_0, window_bounds = array<i64: 8, 16, 16>}, {pipeline_mode = #tpu.pipeline_mode<synchronous>, transform_indices = @transform_1, window_bounds = array<i64: 16, 16>}, {pipeline_mode = #tpu.pipeline_mode<synchronous>, transform_indices = @transform_2, window_bounds = array<i64: 16, 16>}, {transform_indices = @transform_3, window_bounds = array<i64: 8, 8, 8>}, {transform_indices = @transform_4, window_bounds = array<i64: 8, 8, 8>}, {transform_indices = @transform_5, window_bounds = array<i64: 8, 8, 8>}, {transform_indices = @transform_6, window_bounds = array<i64: 8, 8, 8>}]} {
    %c0 = arith.constant 0 : index
    %c0_0 = arith.constant 0 : index
    %c0_1 = arith.constant 0 : index
    %0 = vector.load %arg1[%c0, %c0_0, %c0_1] : memref<8x16x16xf32, #tpu.memory_space<vmem>>, vector<8x16x16xf32>
    %1 = vector.shape_cast %0 : vector<8x16x16xf32> to vector<128x16xf32>
    %c0_2 = arith.constant 0 : index
    %c0_3 = arith.constant 0 : index
    %2 = vector.load %arg3[%c0_2, %c0_3] : memref<16x16xf32, #tpu.memory_space<vmem>>, vector<16x16xf32>
    %cst = arith.constant dense<0.000000e+00> : vector<128x16xf32>
    %3 = tpu.matmul %1, %2, %cst {dimension_numbers = #tpu.dot_dimension_numbers<[1], [0], [0], [1], [0, 0, 1, 1], [], []>} : vector<128x16xf32>, vector<16x16xf32>, vector<128x16xf32> -> vector<128x16xf32>
    %4 = vector.shape_cast %3 : vector<128x16xf32> to vector<8x16x16xf32>
    %c0_4 = arith.constant 0 : index
    %c0_5 = arith.constant 0 : index
    %5 = vector.load %arg2[%c0_4, %c0_5] : memref<16x16xf32, #tpu.memory_space<vmem>>, vector<16x16xf32>
    %6 = vector.shape_cast %5 : vector<16x16xf32> to vector<1x16x16xf32>
    %7 = vector.broadcast %6 : vector<1x16x16xf32> to vector<8x16x16xf32>
    "tpu.trace_start"() <{level = 10 : i32, message = "bik,bkw->biw"}> : () -> ()
    %cst_6 = arith.constant dense<0.000000e+00> : vector<8x16x16xf32>
    %8 = tpu.matmul %7, %4, %cst_6 {dimension_numbers = #tpu.dot_dimension_numbers<[2], [1], [1], [2], [0, 0, 0, 1, 1, 2], [0], [0]>} : vector<8x16x16xf32>, vector<8x16x16xf32>, vector<8x16x16xf32> -> vector<8x16x16xf32>
    "tpu.trace_stop"() : () -> ()
    %9 = vector.extract_strided_slice %8 {offsets = [0, 0, 0], sizes = [8, 8, 8], strides = [1, 1, 1]} : vector<8x16x16xf32> to vector<8x8x8xf32>
    %c0_7 = arith.constant 0 : index
    %c0_8 = arith.constant 0 : index
    %c0_9 = arith.constant 0 : index
    %10 = vector.load %arg4[%c0_7, %c0_8, %c0_9] : memref<8x8x8xf32, #tpu.memory_space<vmem>>, vector<8x8x8xf32>
    tpu.vector_store %arg4[%c0_7, %c0_8, %c0_9], %9 {strides = array<i32>} : memref<8x8x8xf32, #tpu.memory_space<vmem>>, vector<8x8x8xf32>,
    %11 = vector.extract_strided_slice %8 {offsets = [0, 0, 8], sizes = [8, 8, 8], strides = [1, 1, 1]} : vector<8x16x16xf32> to vector<8x8x8xf32>
    %c0_10 = arith.constant 0 : index
    %c0_11 = arith.constant 0 : index
    %c0_12 = arith.constant 0 : index
    %12 = vector.load %arg5[%c0_10, %c0_11, %c0_12] : memref<8x8x8xf32, #tpu.memory_space<vmem>>, vector<8x8x8xf32>
    tpu.vector_store %arg5[%c0_10, %c0_11, %c0_12], %11 {strides = array<i32>} : memref<8x8x8xf32, #tpu.memory_space<vmem>>, vector<8x8x8xf32>,
    %13 = vector.extract_strided_slice %8 {offsets = [0, 8, 0], sizes = [8, 8, 8], strides = [1, 1, 1]} : vector<8x16x16xf32> to vector<8x8x8xf32>
    %c0_13 = arith.constant 0 : index
    %c0_14 = arith.constant 0 : index
    %c0_15 = arith.constant 0 : index
    %14 = vector.load %arg6[%c0_13, %c0_14, %c0_15] : memref<8x8x8xf32, #tpu.memory_space<vmem>>, vector<8x8x8xf32>
    tpu.vector_store %arg6[%c0_13, %c0_14, %c0_15], %13 {strides = array<i32>} : memref<8x8x8xf32, #tpu.memory_space<vmem>>, vector<8x8x8xf32>,
    %15 = vector.extract_strided_slice %8 {offsets = [0, 8, 8], sizes = [8, 8, 8], strides = [1, 1, 1]} : vector<8x16x16xf32> to vector<8x8x8xf32>
    %c0_16 = arith.constant 0 : index
    %c0_17 = arith.constant 0 : index
    %c0_18 = arith.constant 0 : index
    %16 = vector.load %arg7[%c0_16, %c0_17, %c0_18] : memref<8x8x8xf32, #tpu.memory_space<vmem>>, vector<8x8x8xf32>
    tpu.vector_store %arg7[%c0_16, %c0_17, %c0_18], %15 {strides = array<i32>} : memref<8x8x8xf32, #tpu.memory_space<vmem>>, vector<8x8x8xf32>,
    return
  }
  func.func @transform_0(%arg0: i32) -> (i32, i32, i32) {
    %c0_i32 = arith.constant 0 : i32
    %c0_i32_0 = arith.constant 0 : i32
    %c0_i32_1 = arith.constant 0 : i32
    return %arg0, %c0_i32, %c0_i32_0 : i32, i32, i32
  }
  func.func @transform_1(%arg0: i32) -> (i32, i32) {
    %c0_i32 = arith.constant 0 : i32
    %c0_i32_0 = arith.constant 0 : i32
    %c0_i32_1 = arith.constant 0 : i32
    return %c0_i32, %c0_i32_0 : i32, i32
  }
  func.func @transform_2(%arg0: i32) -> (i32, i32) {
    %c0_i32 = arith.constant 0 : i32
    %c0_i32_0 = arith.constant 0 : i32
    %c0_i32_1 = arith.constant 0 : i32
    return %c0_i32, %c0_i32_0 : i32, i32
  }
  func.func @transform_3(%arg0: i32) -> (i32, i32, i32) {
    %c0_i32 = arith.constant 0 : i32
    %c0_i32_0 = arith.constant 0 : i32
    %c0_i32_1 = arith.constant 0 : i32
    return %arg0, %c0_i32, %c0_i32_0 : i32, i32, i32
  }
  func.func @transform_4(%arg0: i32) -> (i32, i32, i32) {
    %c0_i32 = arith.constant 0 : i32
    %c0_i32_0 = arith.constant 0 : i32
    %c0_i32_1 = arith.constant 0 : i32
    return %arg0, %c0_i32, %c0_i32_0 : i32, i32, i32
  }
  func.func @transform_5(%arg0: i32) -> (i32, i32, i32) {
    %c0_i32 = arith.constant 0 : i32
    %c0_i32_0 = arith.constant 0 : i32
    %c0_i32_1 = arith.constant 0 : i32
    return %arg0, %c0_i32, %c0_i32_0 : i32, i32, i32
  }
  func.func @transform_6(%arg0: i32) -> (i32, i32, i32) {
    %c0_i32 = arith.constant 0 : i32
    %c0_i32_0 = arith.constant 0 : i32
    %c0_i32_1 = arith.constant 0 : i32
    return %arg0, %c0_i32, %c0_i32_0 : i32, i32, i32
  }
}

</mosaic_0001>

<llo_original>
// kernel: dwt_forward.1
$region0: #{dwt_forward.1}
  #allocation0 [shape = 'u32[]', space=smem, size = 0x4, offset = 0x4, fixed_abs, tag = 'smem constant byte address 0x4 - core index']
  #allocation1 [shape = 'u32[144,128]{1,0:T(1,128)}', space=vmem, size = 0x12000, scoped, tag = 'internal scratch']
  %s0 = inlined_call_operand.hbm [shape: f32[8,16,16], index: 0, kind: input, shape index: {}]
  %s1 = inlined_call_operand.hbm [shape: f32[16,16], index: 1, kind: input, shape index: {}]
  %s2 = inlined_call_operand.hbm [shape: f32[16,16], index: 2, kind: input, shape index: {}]
  %s3 = inlined_call_operand.hbm [shape: f32[8,8,8], index: 3, kind: output, shape index: {0}]
  %s4 = inlined_call_operand.hbm [shape: f32[8,8,8], index: 4, kind: output, shape index: {1}]
  %s5 = inlined_call_operand.hbm [shape: f32[8,8,8], index: 5, kind: output, shape index: {2}]
  %s6 = inlined_call_operand.hbm [shape: f32[8,8,8], index: 6, kind: output, shape index: {3}]
  %7 = xla_tuple %s3, %s4, %s5, %s6
  %s8 = sld [smem:[#allocation0]]
  $region58: #{dwt_forward.1} parent=0
    _
  %s10 = ssub.s32 1, %s8
  %s11 = scalar_select 0, %s10, %s8
  $region1: #{dwt_forward.1} parent=0
    #allocation2 [shape = 'u8[65536]{0}', space=vmem, size = 0x10000, scoped, tag = 'input window, operand 0, single buffered']
    #allocation3 [shape = 's32[1]{0}', space=sflag, size = 0x4, scoped, tag = 'scoped memory for dwt_forward.1']
    #allocation4 [shape = 's32[1]{0}', space=sflag, size = 0x4, scoped, tag = 'scoped memory for dwt_forward.1']
    #allocation5 [shape = 'u8[8192]{0}', space=vmem, size = 0x2000, scoped, tag = 'input window, operand 1, single buffered']
    #allocation6 [shape = 's32[1]{0}', space=sflag, size = 0x4, scoped, tag = 'scoped memory for dwt_forward.1']
    #allocation7 [shape = 'u8[8192]{0}', space=vmem, size = 0x2000, scoped, tag = 'input window, operand 2, single buffered']
    #allocation8 [shape = 'u8[32768]{0}', space=vmem, size = 0x8000, scoped, tag = 'output window, operand 0, single buffered']
    #allocation9 [shape = 'u8[32768]{0}', space=vmem, size = 0x8000, scoped, tag = 'output window, operand 1, single buffered']
    #allocation10 [shape = 's32[1]{0}', space=sflag, size = 0x4, scoped, tag = 'scoped memory for dwt_forward.1']
    #allocation11 [shape = 'u8[32768]{0}', space=vmem, size = 0x8000, scoped, tag = 'output window, operand 2, single buffered']
    #allocation12 [shape = 'u8[32768]{0}', space=vmem, size = 0x8000, scoped, tag = 'output window, operand 3, single buffered']
    #allocation13 [shape = 's32[1]{0}', space=sflag, size = 0x4, scoped, tag = 'scoped memory for dwt_forward.1']
    %12 = vsyncpa [#allocation3], 0
    %13 = vsyncpa [#allocation6], 0
    %14 = vsyncpa [#allocation4], 0
    %15 = vsyncpa [#allocation10], 0
    %16 = vsyncpa [#allocation13], 0
    // Predicated region
    $region2: #{dwt_forward.1} parent=1 // pred_check
      _
    $region3: #{dwt_forward.1} parent=1 // pred_check_branch
      %18 = sbr.rel (0) target = $region5
    $region4: #{dwt_forward.1} parent=1 // pred_region
      %s20 = ssub.s32 2048, 2048
      %21 = vsyncadd [#allocation3], %s20
      %s22 = sshll.u32 [#allocation2], 4
      %s23 = int_to_ptr.vmem [resolvable:$true] %s22
      %28 = dma.hbm_to_vmem [thread:$0]  %s0, 2048, %s23, [#allocation3], 128, 128, 8
    $region5: #{dwt_forward.1} parent=1 // pred_fallthru
      _
    // Predicated region
    $region6: #{dwt_forward.1} parent=1 // pred_check
      _
    $region7: #{dwt_forward.1} parent=1 // pred_check_branch
      %30 = sbr.rel (0) target = $region9
    $region8: #{dwt_forward.1} parent=1 // pred_region
      %s32 = ssub.s32 256, 256
      %33 = vsyncadd [#allocation6], %s32
      %s34 = sshll.u32 [#allocation5], 4
      %s35 = int_to_ptr.vmem [resolvable:$true] %s34
      %40 = dma.hbm_to_vmem [thread:$0]  %s1, 256, %s35, [#allocation6], 128, 128, 8
    $region9: #{dwt_forward.1} parent=1 // pred_fallthru
      _
    // Predicated region
    $region10: #{dwt_forward.1} parent=1 // pred_check
      _
    $region11: #{dwt_forward.1} parent=1 // pred_check_branch
      %42 = sbr.rel (0) target = $region13
    $region12: #{dwt_forward.1} parent=1 // pred_region
      %s44 = ssub.s32 256, 256
      %45 = vsyncadd [#allocation6], %s44
      %s46 = sshll.u32 [#allocation7], 4
      %s47 = int_to_ptr.vmem [resolvable:$true] %s46
      %52 = dma.hbm_to_vmem [thread:$0]  %s2, 256, %s47, [#allocation6], 128, 128, 8
    $region13: #{dwt_forward.1} parent=1 // pred_fallthru
      _
    // Predicated region
    $region14: #{dwt_forward.1} parent=1 // pred_check
      _
    $region15: #{dwt_forward.1} parent=1 // pred_check_branch
      %54 = sbr.rel (0) target = $region17
    $region16: #{dwt_forward.1} parent=1 // pred_region
      %55 = dma.done [#allocation3], 2048
    $region17: #{dwt_forward.1} parent=1 // pred_fallthru
      _
    // Predicated region
    $region18: #{dwt_forward.1} parent=1 // pred_check
      _
    $region19: #{dwt_forward.1} parent=1 // pred_check_branch
      %57 = sbr.rel (0) target = $region21
    $region20: #{dwt_forward.1} parent=1 // pred_region
      %58 = dma.done [#allocation6], 256
    $region21: #{dwt_forward.1} parent=1 // pred_fallthru
      _
    // Predicated region
    $region22: #{dwt_forward.1} parent=1 // pred_check
      _
    $region23: #{dwt_forward.1} parent=1 // pred_check_branch
      %60 = sbr.rel (0) target = $region25
    $region24: #{dwt_forward.1} parent=1 // pred_region
      %61 = dma.done [#allocation6], 256
    $region25: #{dwt_forward.1} parent=1 // pred_fallthru
      _
    %v62 = vld [vmem:[#allocation2] sm:$0xff]
    %v63 = vld [vmem:[#allocation2 + $0x8] sm:$0xff]
    %v64 = vld [vmem:[#allocation2 + $0x10] sm:$0xff]
    %v65 = vld [vmem:[#allocation2 + $0x18] sm:$0xff]
    %v66 = vld [vmem:[#allocation2 + $0x20] sm:$0xff]
    %v67 = vld [vmem:[#allocation2 + $0x28] sm:$0xff]
    %v68 = vld [vmem:[#allocation2 + $0x30] sm:$0xff]
    %v69 = vld [vmem:[#allocation2 + $0x38] sm:$0xff]
    %v70 = vld [vmem:[#allocation2 + $0x40] sm:$0xff]
    %v71 = vld [vmem:[#allocation2 + $0x48] sm:$0xff]
    %v72 = vld [vmem:[#allocation2 + $0x50] sm:$0xff]
    %v73 = vld [vmem:[#allocation2 + $0x58] sm:$0xff]
    %v74 = vld [vmem:[#allocation2 + $0x60] sm:$0xff]
    %v75 = vld [vmem:[#allocation2 + $0x68] sm:$0xff]
    %v76 = vld [vmem:[#allocation2 + $0x70] sm:$0xff]
    %v77 = vld [vmem:[#allocation2 + $0x78] sm:$0xff]
    %v78 = vld [vmem:[#allocation7] sm:$0xff]
    %v79 = vld [vmem:[#allocation7 + $0x8] sm:$0xff]
    %vm80 = vcmask 130048
    %v82 = vsel %vm80, %v62, 0
    %v85 = vsel %vm80, %v63, 0
    %v88 = vsel %vm80, %v64, 0
    %v91 = vsel %vm80, %v65, 0
    %v94 = vsel %vm80, %v66, 0
    %v97 = vsel %vm80, %v67, 0
    %v100 = vsel %vm80, %v68, 0
    %v103 = vsel %vm80, %v69, 0
    %v106 = vsel %vm80, %v70, 0
    %v109 = vsel %vm80, %v71, 0
    %v112 = vsel %vm80, %v72, 0
    %v115 = vsel %vm80, %v73, 0
    %v118 = vsel %vm80, %v74, 0
    %v121 = vsel %vm80, %v75, 0
    %v124 = vsel %vm80, %v76, 0
    %v127 = vsel %vm80, %v77, 0
    %129 = vmatprep.subr.mxu0 0.0
    %130 = vmatpush1.msra.mxu0 %v78
    %131 = vmatprep.subr.mxu0 0.0
    %132 = vmatpush1.msra.mxu0 %v79
    %133 = vmatprep.subr.mxu0 0.0
    %134 = vmatpush1.msra.mxu0 0.0
    %135 = vmatprep.subr.mxu0 0.0
    %136 = vmatpush1.msra.mxu0 0.0
    %137 = vmatprep.subr.mxu0 0.0
    %138 = vmatpush1.msra.mxu0 0.0
    %139 = vmatprep.subr.mxu0 0.0
    %140 = vmatpush1.msra.mxu0 0.0
    %141 = vmatprep.subr.mxu0 0.0
    %142 = vmatpush1.msra.mxu0 0.0
    %143 = vmatprep.subr.mxu0 0.0
    %144 = vmatpush1.msra.mxu0 0.0
    %145 = vmatprep.subr.mxu0 0.0
    %146 = vmatpush1.msra.mxu0 0.0
    %147 = vmatprep.subr.mxu0 0.0
    %148 = vmatpush1.msra.mxu0 0.0
    %149 = vmatprep.subr.mxu0 0.0
    %150 = vmatpush1.msra.mxu0 0.0
    %151 = vmatprep.subr.mxu0 0.0
    %152 = vmatpush1.msra.mxu0 0.0
    %153 = vmatprep.subr.mxu0 0.0
    %154 = vmatpush1.msra.mxu0 0.0
    %155 = vmatprep.subr.mxu0 0.0
    %156 = vmatpush1.msra.mxu0 0.0
    %157 = vmatprep.subr.mxu0 0.0
    %158 = vmatpush1.msra.mxu0 0.0
    %159 = vmatprep.subr.mxu0 0.0
    %160 = vmatpush1.msra.mxu0 0.0
    %161 = vmatprep.subr.mxu0 0.0
    %162 = vmatpush1.msra.mxu0 0.0
    %163 = vmatprep.subr.mxu0 0.0
    %164 = vmatpush1.msra.mxu0 0.0
    %165 = vmatprep.subr.mxu0 0.0
    %166 = vmatpush1.msra.mxu0 0.0
    %167 = vmatprep.subr.mxu0 0.0
    %168 = vmatpush1.msra.mxu0 0.0
    %169 = vmatprep.subr.mxu0 0.0
    %170 = vmatpush1.msra.mxu0 0.0
    %171 = vmatprep.subr.mxu0 0.0
    %172 = vmatpush1.msra.mxu0 0.0
    %173 = vmatprep.subr.mxu0 0.0
    %174 = vmatpush1.msra.mxu0 0.0
    %175 = vmatprep.subr.mxu0 0.0
    %176 = vmatpush1.msra.mxu0 0.0
    %177 = vmatprep.subr.mxu0 0.0
    %178 = vmatpush1.msra.mxu0 0.0
    %179 = vmatprep.subr.mxu0 0.0
    %180 = vmatpush1.msra.mxu0 0.0
    %181 = vmatprep.subr.mxu0 0.0
    %182 = vmatpush1.msra.mxu0 0.0
    %183 = vmatprep.subr.mxu0 0.0
    %184 = vmatpush1.msra.mxu0 0.0
    %185 = vmatprep.subr.mxu0 0.0
    %186 = vmatpush1.msra.mxu0 0.0
    %187 = vmatprep.subr.mxu0 0.0
    %188 = vmatpush1.msra.mxu0 0.0
    %189 = vmatprep.subr.mxu0 0.0
    %190 = vmatpush1.msra.mxu0 0.0
    %191 = vmatprep.subr.mxu0 0.0
    %192 = vmatpush1.msra.mxu0 0.0
    %193 = vmatprep.mubr.f32.mxu0 0.0
    %194 = vmatmul.mubr.f32.gmra.mrb[0].mxu0 %v82
    %v195 = vpop.f32.mrb[0].mxu0
    %v196 = vadd.f32 0.0, %v195
    %v197 = vpop.f32.mrb[0].mxu0
    %198 = vmatprep.mubr.f32.mxu0 0.0
    %199 = vmatmul.mubr.f32.gmra.mrb[0].mxu0 %v85
    %v200 = vpop.f32.mrb[0].mxu0
    %v201 = vadd.f32 0.0, %v200
    %v202 = vpop.f32.mrb[0].mxu0
    %203 = vmatprep.mubr.f32.mxu0 0.0
    %204 = vmatmul.mubr.f32.gmra.mrb[0].mxu0 %v88
    %v205 = vpop.f32.mrb[0].mxu0
    %v206 = vadd.f32 0.0, %v205
    %v207 = vpop.f32.mrb[0].mxu0
    %208 = vmatprep.mubr.f32.mxu0 0.0
    %209 = vmatmul.mubr.f32.gmra.mrb[0].mxu0 %v91
    %v210 = vpop.f32.mrb[0].mxu0
    %v211 = vadd.f32 0.0, %v210
    %v212 = vpop.f32.mrb[0].mxu0
    %213 = vmatprep.mubr.f32.mxu0 0.0
    %214 = vmatmul.mubr.f32.gmra.mrb[0].mxu0 %v94
    %v215 = vpop.f32.mrb[0].mxu0
    %v216 = vadd.f32 0.0, %v215
    %v217 = vpop.f32.mrb[0].mxu0
    %218 = vmatprep.mubr.f32.mxu0 0.0
    %219 = vmatmul.mubr.f32.gmra.mrb[0].mxu0 %v97
    %v220 = vpop.f32.mrb[0].mxu0
    %v221 = vadd.f32 0.0, %v220
    %v222 = vpop.f32.mrb[0].mxu0
    %223 = vmatprep.mubr.f32.mxu0 0.0
    %224 = vmatmul.mubr.f32.gmra.mrb[0].mxu0 %v100
    %v225 = vpop.f32.mrb[0].mxu0
    %v226 = vadd.f32 0.0, %v225
    %v227 = vpop.f32.mrb[0].mxu0
    %228 = vmatprep.mubr.f32.mxu0 0.0
    %229 = vmatmul.mubr.f32.gmra.mrb[0].mxu0 %v103
    %v230 = vpop.f32.mrb[0].mxu0
    %v231 = vadd.f32 0.0, %v230
    %v232 = vpop.f32.mrb[0].mxu0
    %233 = vmatprep.mubr.f32.mxu0 0.0
    %234 = vmatmul.mubr.f32.gmra.mrb[0].mxu0 %v106
    %v235 = vpop.f32.mrb[0].mxu0
    %v236 = vadd.f32 0.0, %v235
    %v237 = vpop.f32.mrb[0].mxu0
    %238 = vmatprep.mubr.f32.mxu0 0.0
    %239 = vmatmul.mubr.f32.gmra.mrb[0].mxu0 %v109
    %v240 = vpop.f32.mrb[0].mxu0
    %v241 = vadd.f32 0.0, %v240
    %v242 = vpop.f32.mrb[0].mxu0
    %243 = vmatprep.mubr.f32.mxu0 0.0
    %244 = vmatmul.mubr.f32.gmra.mrb[0].mxu0 %v112
    %v245 = vpop.f32.mrb[0].mxu0
    %v246 = vadd.f32 0.0, %v245
    %v247 = vpop.f32.mrb[0].mxu0
    %248 = vmatprep.mubr.f32.mxu0 0.0
    %249 = vmatmul.mubr.f32.gmra.mrb[0].mxu0 %v115
    %v250 = vpop.f32.mrb[0].mxu0
    %v251 = vadd.f32 0.0, %v250
    %v252 = vpop.f32.mrb[0].mxu0
    %253 = vmatprep.mubr.f32.mxu0 0.0
    %254 = vmatmul.mubr.f32.gmra.mrb[0].mxu0 %v118
    %v255 = vpop.f32.mrb[0].mxu0
    %v256 = vadd.f32 0.0, %v255
    %v257 = vpop.f32.mrb[0].mxu0
    %258 = vmatprep.mubr.f32.mxu0 0.0
    %259 = vmatmul.mubr.f32.gmra.mrb[0].mxu0 %v121
    %v260 = vpop.f32.mrb[0].mxu0
    %v261 = vadd.f32 0.0, %v260
    %v262 = vpop.f32.mrb[0].mxu0
    %263 = vmatprep.mubr.f32.mxu0 0.0
    %264 = vmatmul.mubr.f32.gmra.mrb[0].mxu0 %v124
    %v265 = vpop.f32.mrb[0].mxu0
    %v266 = vadd.f32 0.0, %v265
    %v267 = vpop.f32.mrb[0].mxu0
    %268 = vmatprep.mubr.f32.mxu0 0.0
    %269 = vmatmul.mubr.f32.gmra.mrb[0].mxu0 %v127
    %v270 = vpop.f32.mrb[0].mxu0
    %v271 = vadd.f32 0.0, %v270
    %v272 = vpop.f32.mrb[0].mxu0
    %273 = vdwg.mxu0
    %v274 = vld [vmem:[#allocation5] sm:$0xff]
    %v275 = vld [vmem:[#allocation5 + $0x8] sm:$0xff]
    %v277 = vsel %vm80, %v274, 0
    %v280 = vsel %vm80, %v275, 0
    %282 = vmatprep.subr.mxu0 0.0
    %283 = vmatpush1.msra.mxu0 %v196
    %284 = vmatprep.subr.mxu0 0.0
    %285 = vmatpush1.msra.mxu0 %v201
    %286 = vmatprep.subr.mxu0 0.0
    %287 = vmatpush1.msra.mxu0 0.0
    %288 = vmatprep.subr.mxu0 0.0
    %289 = vmatpush1.msra.mxu0 0.0
    %290 = vmatprep.subr.mxu0 0.0
    %291 = vmatpush1.msra.mxu0 0.0
    %292 = vmatprep.subr.mxu0 0.0
    %293 = vmatpush1.msra.mxu0 0.0
    %294 = vmatprep.subr.mxu0 0.0
    %295 = vmatpush1.msra.mxu0 0.0
    %296 = vmatprep.subr.mxu0 0.0
    %297 = vmatpush1.msra.mxu0 0.0
    %298 = vmatprep.subr.mxu0 0.0
    %299 = vmatpush1.msra.mxu0 0.0
    %300 = vmatprep.subr.mxu0 0.0
    %301 = vmatpush1.msra.mxu0 0.0
    %302 = vmatprep.subr.mxu0 0.0
    %303 = vmatpush1.msra.mxu0 0.0
    %304 = vmatprep.subr.mxu0 0.0
    %305 = vmatpush1.msra.mxu0 0.0
    %306 = vmatprep.subr.mxu0 0.0
    %307 = vmatpush1.msra.mxu0 0.0
    %308 = vmatprep.subr.mxu0 0.0
    %309 = vmatpush1.msra.mxu0 0.0
    %310 = vmatprep.subr.mxu0 0.0
    %311 = vmatpush1.msra.mxu0 0.0
    %312 = vmatprep.subr.mxu0 0.0
    %313 = vmatpush1.msra.mxu0 0.0
    %314 = vmatprep.subr.mxu0 0.0
    %315 = vmatpush1.msra.mxu0 0.0
    %316 = vmatprep.subr.mxu0 0.0
    %317 = vmatpush1.msra.mxu0 0.0
    %318 = vmatprep.subr.mxu0 0.0
    %319 = vmatpush1.msra.mxu0 0.0
    %320 = vmatprep.subr.mxu0 0.0
    %321 = vmatpush1.msra.mxu0 0.0
    %322 = vmatprep.subr.mxu0 0.0
    %323 = vmatpush1.msra.mxu0 0.0
    %324 = vmatprep.subr.mxu0 0.0
    %325 = vmatpush1.msra.mxu0 0.0
    %326 = vmatprep.subr.mxu0 0.0
    %327 = vmatpush1.msra.mxu0 0.0
    %328 = vmatprep.subr.mxu0 0.0
    %329 = vmatpush1.msra.mxu0 0.0
    %330 = vmatprep.subr.mxu0 0.0
    %331 = vmatpush1.msra.mxu0 0.0
    %332 = vmatprep.subr.mxu0 0.0
    %333 = vmatpush1.msra.mxu0 0.0
    %334 = vmatprep.subr.mxu0 0.0
    %335 = vmatpush1.msra.mxu0 0.0
    %336 = vmatprep.subr.mxu0 0.0
    %337 = vmatpush1.msra.mxu0 0.0
    %338 = vmatprep.subr.mxu0 0.0
    %339 = vmatpush1.msra.mxu0 0.0
    %340 = vmatprep.subr.mxu0 0.0
    %341 = vmatpush1.msra.mxu0 0.0
    %342 = vmatprep.subr.mxu0 0.0
    %343 = vmatpush1.msra.mxu0 0.0
    %344 = vmatprep.subr.mxu0 0.0
    %345 = vmatpush1.msra.mxu0 0.0
    %346 = vmatprep.mubr.f32.mxu0 0.0
    %347 = vmatmul.mubr.f32.gmra.mrb[0].mxu0 %v277
    %v348 = vpop.f32.mrb[0].mxu0
    %v349 = vadd.f32 0.0, %v348
    %v350 = vpop.f32.mrb[0].mxu0
    %351 = vmatprep.mubr.f32.mxu0 0.0
    %352 = vmatmul.mubr.f32.gmra.mrb[0].mxu0 %v280
    %v353 = vpop.f32.mrb[0].mxu0
    %v354 = vadd.f32 0.0, %v353
    %v355 = vpop.f32.mrb[0].mxu0
    %356 = vdwg.mxu0
    %357 = vmatprep.subr.mxu0 0.0
    %358 = vmatpush1.msra.mxu0 %v206
    %359 = vmatprep.subr.mxu0 0.0
    %360 = vmatpush1.msra.mxu0 %v211
    %361 = vmatprep.subr.mxu0 0.0
    %362 = vmatpush1.msra.mxu0 0.0
    %363 = vmatprep.subr.mxu0 0.0
    %364 = vmatpush1.msra.mxu0 0.0
    %365 = vmatprep.subr.mxu0 0.0
    %366 = vmatpush1.msra.mxu0 0.0
    %367 = vmatprep.subr.mxu0 0.0
    %368 = vmatpush1.msra.mxu0 0.0
    %369 = vmatprep.subr.mxu0 0.0
    %370 = vmatpush1.msra.mxu0 0.0
    %371 = vmatprep.subr.mxu0 0.0
    %372 = vmatpush1.msra.mxu0 0.0
    %373 = vmatprep.subr.mxu0 0.0
    %374 = vmatpush1.msra.mxu0 0.0
    %375 = vmatprep.subr.mxu0 0.0
    %376 = vmatpush1.msra.mxu0 0.0
    %377 = vmatprep.subr.mxu0 0.0
    %378 = vmatpush1.msra.mxu0 0.0
    %379 = vmatprep.subr.mxu0 0.0
    %380 = vmatpush1.msra.mxu0 0.0
    %381 = vmatprep.subr.mxu0 0.0
    %382 = vmatpush1.msra.mxu0 0.0
    %383 = vmatprep.subr.mxu0 0.0
    %384 = vmatpush1.msra.mxu0 0.0
    %385 = vmatprep.subr.mxu0 0.0
    %386 = vmatpush1.msra.mxu0 0.0
    %387 = vmatprep.subr.mxu0 0.0
    %388 = vmatpush1.msra.mxu0 0.0
    %389 = vmatprep.subr.mxu0 0.0
    %390 = vmatpush1.msra.mxu0 0.0
    %391 = vmatprep.subr.mxu0 0.0
    %392 = vmatpush1.msra.mxu0 0.0
    %393 = vmatprep.subr.mxu0 0.0
    %394 = vmatpush1.msra.mxu0 0.0
    %395 = vmatprep.subr.mxu0 0.0
    %396 = vmatpush1.msra.mxu0 0.0
    %397 = vmatprep.subr.mxu0 0.0
    %398 = vmatpush1.msra.mxu0 0.0
    %399 = vmatprep.subr.mxu0 0.0
    %400 = vmatpush1.msra.mxu0 0.0
    %401 = vmatprep.subr.mxu0 0.0
    %402 = vmatpush1.msra.mxu0 0.0
    %403 = vmatprep.subr.mxu0 0.0
    %404 = vmatpush1.msra.mxu0 0.0
    %405 = vmatprep.subr.mxu0 0.0
    %406 = vmatpush1.msra.mxu0 0.0
    %407 = vmatprep.subr.mxu0 0.0
    %408 = vmatpush1.msra.mxu0 0.0
    %409 = vmatprep.subr.mxu0 0.0
    %410 = vmatpush1.msra.mxu0 0.0
    %411 = vmatprep.subr.mxu0 0.0
    %412 = vmatpush1.msra.mxu0 0.0
    %413 = vmatprep.subr.mxu0 0.0
    %414 = vmatpush1.msra.mxu0 0.0
    %415 = vmatprep.subr.mxu0 0.0
    %416 = vmatpush1.msra.mxu0 0.0
    %417 = vmatprep.subr.mxu0 0.0
    %418 = vmatpush1.msra.mxu0 0.0
    %419 = vmatprep.subr.mxu0 0.0
    %420 = vmatpush1.msra.mxu0 0.0
    %421 = vmatprep.mubr.f32.mxu0 0.0
    %422 = vmatmul.mubr.f32.gmra.mrb[0].mxu0 %v277
    %v423 = vpop.f32.mrb[0].mxu0
    %v424 = vadd.f32 0.0, %v423
    %v425 = vpop.f32.mrb[0].mxu0
    %426 = vmatprep.mubr.f32.mxu0 0.0
    %427 = vmatmul.mubr.f32.gmra.mrb[0].mxu0 %v280
    %v428 = vpop.f32.mrb[0].mxu0
    %v429 = vadd.f32 0.0, %v428
    %v430 = vpop.f32.mrb[0].mxu0
    %431 = vdwg.mxu0
    %432 = vmatprep.subr.mxu0 0.0
    %433 = vmatpush1.msra.mxu0 %v216
    %434 = vmatprep.subr.mxu0 0.0
    %435 = vmatpush1.msra.mxu0 %v221
    %436 = vmatprep.subr.mxu0 0.0
    %437 = vmatpush1.msra.mxu0 0.0
    %438 = vmatprep.subr.mxu0 0.0
    %439 = vmatpush1.msra.mxu0 0.0
    %440 = vmatprep.subr.mxu0 0.0
    %441 = vmatpush1.msra.mxu0 0.0
    %442 = vmatprep.subr.mxu0 0.0
    %443 = vmatpush1.msra.mxu0 0.0
    %444 = vmatprep.subr.mxu0 0.0
    %445 = vmatpush1.msra.mxu0 0.0
    %446 = vmatprep.subr.mxu0 0.0
    %447 = vmatpush1.msra.mxu0 0.0
    %448 = vmatprep.subr.mxu0 0.0
    %449 = vmatpush1.msra.mxu0 0.0
    %450 = vmatprep.subr.mxu0 0.0
    %451 = vmatpush1.msra.mxu0 0.0
    %452 = vmatprep.subr.mxu0 0.0
    %453 = vmatpush1.msra.mxu0 0.0
    %454 = vmatprep.subr.mxu0 0.0
    %455 = vmatpush1.msra.mxu0 0.0
    %456 = vmatprep.subr.mxu0 0.0
    %457 = vmatpush1.msra.mxu0 0.0
    %458 = vmatprep.subr.mxu0 0.0
    %459 = vmatpush1.msra.mxu0 0.0
    %460 = vmatprep.subr.mxu0 0.0
    %461 = vmatpush1.msra.mxu0 0.0
    %462 = vmatprep.subr.mxu0 0.0
    %463 = vmatpush1.msra.mxu0 0.0
    %464 = vmatprep.subr.mxu0 0.0
    %465 = vmatpush1.msra.mxu0 0.0
    %466 = vmatprep.subr.mxu0 0.0
    %467 = vmatpush1.msra.mxu0 0.0
    %468 = vmatprep.subr.mxu0 0.0
    %469 = vmatpush1.msra.mxu0 0.0
    %470 = vmatprep.subr.mxu0 0.0
    %471 = vmatpush1.msra.mxu0 0.0
    %472 = vmatprep.subr.mxu0 0.0
    %473 = vmatpush1.msra.mxu0 0.0
    %474 = vmatprep.subr.mxu0 0.0
    %475 = vmatpush1.msra.mxu0 0.0
    %476 = vmatprep.subr.mxu0 0.0
    %477 = vmatpush1.msra.mxu0 0.0
    %478 = vmatprep.subr.mxu0 0.0
    %479 = vmatpush1.msra.mxu0 0.0
    %480 = vmatprep.subr.mxu0 0.0
    %481 = vmatpush1.msra.mxu0 0.0
    %482 = vmatprep.subr.mxu0 0.0
    %483 = vmatpush1.msra.mxu0 0.0
    %484 = vmatprep.subr.mxu0 0.0
    %485 = vmatpush1.msra.mxu0 0.0
    %486 = vmatprep.subr.mxu0 0.0
    %487 = vmatpush1.msra.mxu0 0.0
    %488 = vmatprep.subr.mxu0 0.0
    %489 = vmatpush1.msra.mxu0 0.0
    %490 = vmatprep.subr.mxu0 0.0
    %491 = vmatpush1.msra.mxu0 0.0
    %492 = vmatprep.subr.mxu0 0.0
    %493 = vmatpush1.msra.mxu0 0.0
    %494 = vmatprep.subr.mxu0 0.0
    %495 = vmatpush1.msra.mxu0 0.0
    %496 = vmatprep.mubr.f32.mxu0 0.0
    %497 = vmatmul.mubr.f32.gmra.mrb[0].mxu0 %v277
    %v498 = vpop.f32.mrb[0].mxu0
    %v499 = vadd.f32 0.0, %v498
    %v500 = vpop.f32.mrb[0].mxu0
    %501 = vmatprep.mubr.f32.mxu0 0.0
    %502 = vmatmul.mubr.f32.gmra.mrb[0].mxu0 %v280
    %v503 = vpop.f32.mrb[0].mxu0
    %v504 = vadd.f32 0.0, %v503
    %v505 = vpop.f32.mrb[0].mxu0
    %506 = vdwg.mxu0
    %507 = vmatprep.subr.mxu0 0.0
    %508 = vmatpush1.msra.mxu0 %v226
    %509 = vmatprep.subr.mxu0 0.0
    %510 = vmatpush1.msra.mxu0 %v231
    %511 = vmatprep.subr.mxu0 0.0
    %512 = vmatpush1.msra.mxu0 0.0
    %513 = vmatprep.subr.mxu0 0.0
    %514 = vmatpush1.msra.mxu0 0.0
    %515 = vmatprep.subr.mxu0 0.0
    %516 = vmatpush1.msra.mxu0 0.0
    %517 = vmatprep.subr.mxu0 0.0
    %518 = vmatpush1.msra.mxu0 0.0
    %519 = vmatprep.subr.mxu0 0.0
    %520 = vmatpush1.msra.mxu0 0.0
    %521 = vmatprep.subr.mxu0 0.0
    %522 = vmatpush1.msra.mxu0 0.0
    %523 = vmatprep.subr.mxu0 0.0
    %524 = vmatpush1.msra.mxu0 0.0
    %525 = vmatprep.subr.mxu0 0.0
    %526 = vmatpush1.msra.mxu0 0.0
    %527 = vmatprep.subr.mxu0 0.0
    %528 = vmatpush1.msra.mxu0 0.0
    %529 = vmatprep.subr.mxu0 0.0
    %530 = vmatpush1.msra.mxu0 0.0
    %531 = vmatprep.subr.mxu0 0.0
    %532 = vmatpush1.msra.mxu0 0.0
    %533 = vmatprep.subr.mxu0 0.0
    %534 = vmatpush1.msra.mxu0 0.0
    %535 = vmatprep.subr.mxu0 0.0
    %536 = vmatpush1.msra.mxu0 0.0
    %537 = vmatprep.subr.mxu0 0.0
    %538 = vmatpush1.msra.mxu0 0.0
    %539 = vmatprep.subr.mxu0 0.0
    %540 = vmatpush1.msra.mxu0 0.0
    %541 = vmatprep.subr.mxu0 0.0
    %542 = vmatpush1.msra.mxu0 0.0
    %543 = vmatprep.subr.mxu0 0.0
    %544 = vmatpush1.msra.mxu0 0.0
    %545 = vmatprep.subr.mxu0 0.0
    %546 = vmatpush1.msra.mxu0 0.0
    %547 = vmatprep.subr.mxu0 0.0
    %548 = vmatpush1.msra.mxu0 0.0
    %549 = vmatprep.subr.mxu0 0.0
    %550 = vmatpush1.msra.mxu0 0.0
    %551 = vmatprep.subr.mxu0 0.0
    %552 = vmatpush1.msra.mxu0 0.0
    %553 = vmatprep.subr.mxu0 0.0
    %554 = vmatpush1.msra.mxu0 0.0
    %555 = vmatprep.subr.mxu0 0.0
    %556 = vmatpush1.msra.mxu0 0.0
    %557 = vmatprep.subr.mxu0 0.0
    %558 = vmatpush1.msra.mxu0 0.0
    %559 = vmatprep.subr.mxu0 0.0
    %560 = vmatpush1.msra.mxu0 0.0
    %561 = vmatprep.subr.mxu0 0.0
    %562 = vmatpush1.msra.mxu0 0.0
    %563 = vmatprep.subr.mxu0 0.0
    %564 = vmatpush1.msra.mxu0 0.0
    %565 = vmatprep.subr.mxu0 0.0
    %566 = vmatpush1.msra.mxu0 0.0
    %567 = vmatprep.subr.mxu0 0.0
    %568 = vmatpush1.msra.mxu0 0.0
    %569 = vmatprep.subr.mxu0 0.0
    %570 = vmatpush1.msra.mxu0 0.0
    %571 = vmatprep.mubr.f32.mxu0 0.0
    %572 = vmatmul.mubr.f32.gmra.mrb[0].mxu0 %v277
    %v573 = vpop.f32.mrb[0].mxu0
    %v574 = vadd.f32 0.0, %v573
    %v575 = vpop.f32.mrb[0].mxu0
    %576 = vmatprep.mubr.f32.mxu0 0.0
    %577 = vmatmul.mubr.f32.gmra.mrb[0].mxu0 %v280
    %v578 = vpop.f32.mrb[0].mxu0
    %v579 = vadd.f32 0.0, %v578
    %v580 = vpop.f32.mrb[0].mxu0
    %581 = vdwg.mxu0
    %582 = vmatprep.subr.mxu0 0.0
    %583 = vmatpush1.msra.mxu0 %v236
    %584 = vmatprep.subr.mxu0 0.0
    %585 = vmatpush1.msra.mxu0 %v241
    %586 = vmatprep.subr.mxu0 0.0
    %587 = vmatpush1.msra.mxu0 0.0
    %588 = vmatprep.subr.mxu0 0.0
    %589 = vmatpush1.msra.mxu0 0.0
    %590 = vmatprep.subr.mxu0 0.0
    %591 = vmatpush1.msra.mxu0 0.0
    %592 = vmatprep.subr.mxu0 0.0
    %593 = vmatpush1.msra.mxu0 0.0
    %594 = vmatprep.subr.mxu0 0.0
    %595 = vmatpush1.msra.mxu0 0.0
    %596 = vmatprep.subr.mxu0 0.0
    %597 = vmatpush1.msra.mxu0 0.0
    %598 = vmatprep.subr.mxu0 0.0
    %599 = vmatpush1.msra.mxu0 0.0
    %600 = vmatprep.subr.mxu0 0.0
    %601 = vmatpush1.msra.mxu0 0.0
    %602 = vmatprep.subr.mxu0 0.0
    %603 = vmatpush1.msra.mxu0 0.0
    %604 = vmatprep.subr.mxu0 0.0
    %605 = vmatpush1.msra.mxu0 0.0
    %606 = vmatprep.subr.mxu0 0.0
    %607 = vmatpush1.msra.mxu0 0.0
    %608 = vmatprep.subr.mxu0 0.0
    %609 = vmatpush1.msra.mxu0 0.0
    %610 = vmatprep.subr.mxu0 0.0
    %611 = vmatpush1.msra.mxu0 0.0
    %612 = vmatprep.subr.mxu0 0.0
    %613 = vmatpush1.msra.mxu0 0.0
    %614 = vmatprep.subr.mxu0 0.0
    %615 = vmatpush1.msra.mxu0 0.0
    %616 = vmatprep.subr.mxu0 0.0
    %617 = vmatpush1.msra.mxu0 0.0
    %618 = vmatprep.subr.mxu0 0.0
    %619 = vmatpush1.msra.mxu0 0.0
    %620 = vmatprep.subr.mxu0 0.0
    %621 = vmatpush1.msra.mxu0 0.0
    %622 = vmatprep.subr.mxu0 0.0
    %623 = vmatpush1.msra.mxu0 0.0
    %624 = vmatprep.subr.mxu0 0.0
    %625 = vmatpush1.msra.mxu0 0.0
    %626 = vmatprep.subr.mxu0 0.0
    %627 = vmatpush1.msra.mxu0 0.0
    %628 = vmatprep.subr.mxu0 0.0
    %629 = vmatpush1.msra.mxu0 0.0
    %630 = vmatprep.subr.mxu0 0.0
    %631 = vmatpush1.msra.mxu0 0.0
    %632 = vmatprep.subr.mxu0 0.0
    %633 = vmatpush1.msra.mxu0 0.0
    %634 = vmatprep.subr.mxu0 0.0
    %635 = vmatpush1.msra.mxu0 0.0
    %636 = vmatprep.subr.mxu0 0.0
    %637 = vmatpush1.msra.mxu0 0.0
    %638 = vmatprep.subr.mxu0 0.0
    %639 = vmatpush1.msra.mxu0 0.0
    %640 = vmatprep.subr.mxu0 0.0
    %641 = vmatpush1.msra.mxu0 0.0
    %642 = vmatprep.subr.mxu0 0.0
    %643 = vmatpush1.msra.mxu0 0.0
    %644 = vmatprep.subr.mxu0 0.0
    %645 = vmatpush1.msra.mxu0 0.0
    %646 = vmatprep.mubr.f32.mxu0 0.0
    %647 = vmatmul.mubr.f32.gmra.mrb[0].mxu0 %v277
    %v648 = vpop.f32.mrb[0].mxu0
    %v649 = vadd.f32 0.0, %v648
    %v650 = vpop.f32.mrb[0].mxu0
    %651 = vmatprep.mubr.f32.mxu0 0.0
    %652 = vmatmul.mubr.f32.gmra.mrb[0].mxu0 %v280
    %v653 = vpop.f32.mrb[0].mxu0
    %v654 = vadd.f32 0.0, %v653
    %v655 = vpop.f32.mrb[0].mxu0
    %656 = vdwg.mxu0
    %657 = vmatprep.subr.mxu0 0.0
    %658 = vmatpush1.msra.mxu0 %v246
    %659 = vmatprep.subr.mxu0 0.0
    %660 = vmatpush1.msra.mxu0 %v251
    %661 = vmatprep.subr.mxu0 0.0
    %662 = vmatpush1.msra.mxu0 0.0
    %663 = vmatprep.subr.mxu0 0.0
    %664 = vmatpush1.msra.mxu0 0.0
    %665 = vmatprep.subr.mxu0 0.0
    %666 = vmatpush1.msra.mxu0 0.0
    %667 = vmatprep.subr.mxu0 0.0
    %668 = vmatpush1.msra.mxu0 0.0
    %669 = vmatprep.subr.mxu0 0.0
    %670 = vmatpush1.msra.mxu0 0.0
    %671 = vmatprep.subr.mxu0 0.0
    %672 = vmatpush1.msra.mxu0 0.0
    %673 = vmatprep.subr.mxu0 0.0
    %674 = vmatpush1.msra.mxu0 0.0
    %675 = vmatprep.subr.mxu0 0.0
    %676 = vmatpush1.msra.mxu0 0.0
    %677 = vmatprep.subr.mxu0 0.0
    %678 = vmatpush1.msra.mxu0 0.0
    %679 = vmatprep.subr.mxu0 0.0
    %680 = vmatpush1.msra.mxu0 0.0
    %681 = vmatprep.subr.mxu0 0.0
    %682 = vmatpush1.msra.mxu0 0.0
    %683 = vmatprep.subr.mxu0 0.0
    %684 = vmatpush1.msra.mxu0 0.0
    %685 = vmatprep.subr.mxu0 0.0
    %686 = vmatpush1.msra.mxu0 0.0
    %687 = vmatprep.subr.mxu0 0.0
    %688 = vmatpush1.msra.mxu0 0.0
    %689 = vmatprep.subr.mxu0 0.0
    %690 = vmatpush1.msra.mxu0 0.0
    %691 = vmatprep.subr.mxu0 0.0
    %692 = vmatpush1.msra.mxu0 0.0
    %693 = vmatprep.subr.mxu0 0.0
    %694 = vmatpush1.msra.mxu0 0.0
    %695 = vmatprep.subr.mxu0 0.0
    %696 = vmatpush1.msra.mxu0 0.0
    %697 = vmatprep.subr.mxu0 0.0
    %698 = vmatpush1.msra.mxu0 0.0
    %699 = vmatprep.subr.mxu0 0.0
    %700 = vmatpush1.msra.mxu0 0.0
    %701 = vmatprep.subr.mxu0 0.0
    %702 = vmatpush1.msra.mxu0 0.0
    %703 = vmatprep.subr.mxu0 0.0
    %704 = vmatpush1.msra.mxu0 0.0
    %705 = vmatprep.subr.mxu0 0.0
    %706 = vmatpush1.msra.mxu0 0.0
    %707 = vmatprep.subr.mxu0 0.0
    %708 = vmatpush1.msra.mxu0 0.0
    %709 = vmatprep.subr.mxu0 0.0
    %710 = vmatpush1.msra.mxu0 0.0
    %711 = vmatprep.subr.mxu0 0.0
    %712 = vmatpush1.msra.mxu0 0.0
    %713 = vmatprep.subr.mxu0 0.0
    %714 = vmatpush1.msra.mxu0 0.0
    %715 = vmatprep.subr.mxu0 0.0
    %716 = vmatpush1.msra.mxu0 0.0
    %717 = vmatprep.subr.mxu0 0.0
    %718 = vmatpush1.msra.mxu0 0.0
    %719 = vmatprep.subr.mxu0 0.0
    %720 = vmatpush1.msra.mxu0 0.0
    %721 = vmatprep.mubr.f32.mxu0 0.0
    %722 = vmatmul.mubr.f32.gmra.mrb[0].mxu0 %v277
    %v723 = vpop.f32.mrb[0].mxu0
    %v724 = vadd.f32 0.0, %v723
    %v725 = vpop.f32.mrb[0].mxu0
    %726 = vmatprep.mubr.f32.mxu0 0.0
    %727 = vmatmul.mubr.f32.gmra.mrb[0].mxu0 %v280
    %v728 = vpop.f32.mrb[0].mxu0
    %v729 = vadd.f32 0.0, %v728
    %v730 = vpop.f32.mrb[0].mxu0
    %731 = vdwg.mxu0
    %732 = vmatprep.subr.mxu0 0.0
    %733 = vmatpush1.msra.mxu0 %v256
    %734 = vmatprep.subr.mxu0 0.0
    %735 = vmatpush1.msra.mxu0 %v261
    %736 = vmatprep.subr.mxu0 0.0
    %737 = vmatpush1.msra.mxu0 0.0
    %738 = vmatprep.subr.mxu0 0.0
    %739 = vmatpush1.msra.mxu0 0.0
    %740 = vmatprep.subr.mxu0 0.0
    %741 = vmatpush1.msra.mxu0 0.0
    %742 = vmatprep.subr.mxu0 0.0
    %743 = vmatpush1.msra.mxu0 0.0
    %744 = vmatprep.subr.mxu0 0.0
    %745 = vmatpush1.msra.mxu0 0.0
    %746 = vmatprep.subr.mxu0 0.0
    %747 = vmatpush1.msra.mxu0 0.0
    %748 = vmatprep.subr.mxu0 0.0
    %749 = vmatpush1.msra.mxu0 0.0
    %750 = vmatprep.subr.mxu0 0.0
    %751 = vmatpush1.msra.mxu0 0.0
    %752 = vmatprep.subr.mxu0 0.0
    %753 = vmatpush1.msra.mxu0 0.0
    %754 = vmatprep.subr.mxu0 0.0
    %755 = vmatpush1.msra.mxu0 0.0
    %756 = vmatprep.subr.mxu0 0.0
    %757 = vmatpush1.msra.mxu0 0.0
    %758 = vmatprep.subr.mxu0 0.0
    %759 = vmatpush1.msra.mxu0 0.0
    %760 = vmatprep.subr.mxu0 0.0
    %761 = vmatpush1.msra.mxu0 0.0
    %762 = vmatprep.subr.mxu0 0.0
    %763 = vmatpush1.msra.mxu0 0.0
    %764 = vmatprep.subr.mxu0 0.0
    %765 = vmatpush1.msra.mxu0 0.0
    %766 = vmatprep.subr.mxu0 0.0
    %767 = vmatpush1.msra.mxu0 0.0
    %768 = vmatprep.subr.mxu0 0.0
    %769 = vmatpush1.msra.mxu0 0.0
    %770 = vmatprep.subr.mxu0 0.0
    %771 = vmatpush1.msra.mxu0 0.0
    %772 = vmatprep.subr.mxu0 0.0
    %773 = vmatpush1.msra.mxu0 0.0
    %774 = vmatprep.subr.mxu0 0.0
    %775 = vmatpush1.msra.mxu0 0.0
    %776 = vmatprep.subr.mxu0 0.0
    %777 = vmatpush1.msra.mxu0 0.0
    %778 = vmatprep.subr.mxu0 0.0
    %779 = vmatpush1.msra.mxu0 0.0
    %780 = vmatprep.subr.mxu0 0.0
    %781 = vmatpush1.msra.mxu0 0.0
    %782 = vmatprep.subr.mxu0 0.0
    %783 = vmatpush1.msra.mxu0 0.0
    %784 = vmatprep.subr.mxu0 0.0
    %785 = vmatpush1.msra.mxu0 0.0
    %786 = vmatprep.subr.mxu0 0.0
    %787 = vmatpush1.msra.mxu0 0.0
    %788 = vmatprep.subr.mxu0 0.0
    %789 = vmatpush1.msra.mxu0 0.0
    %790 = vmatprep.subr.mxu0 0.0
    %791 = vmatpush1.msra.mxu0 0.0
    %792 = vmatprep.subr.mxu0 0.0
    %793 = vmatpush1.msra.mxu0 0.0
    %794 = vmatprep.subr.mxu0 0.0
    %795 = vmatpush1.msra.mxu0 0.0
    %796 = vmatprep.mubr.f32.mxu0 0.0
    %797 = vmatmul.mubr.f32.gmra.mrb[0].mxu0 %v277
    %v798 = vpop.f32.mrb[0].mxu0
    %v799 = vadd.f32 0.0, %v798
    %v800 = vpop.f32.mrb[0].mxu0
    %801 = vmatprep.mubr.f32.mxu0 0.0
    %802 = vmatmul.mubr.f32.gmra.mrb[0].mxu0 %v280
    %v803 = vpop.f32.mrb[0].mxu0
    %v804 = vadd.f32 0.0, %v803
    %v805 = vpop.f32.mrb[0].mxu0
    %806 = vdwg.mxu0
    %807 = vmatprep.subr.mxu0 0.0
    %808 = vmatpush1.msra.mxu0 %v266
    %809 = vmatprep.subr.mxu0 0.0
    %810 = vmatpush1.msra.mxu0 %v271
    %811 = vmatprep.subr.mxu0 0.0
    %812 = vmatpush1.msra.mxu0 0.0
    %813 = vmatprep.subr.mxu0 0.0
    %814 = vmatpush1.msra.mxu0 0.0
    %815 = vmatprep.subr.mxu0 0.0
    %816 = vmatpush1.msra.mxu0 0.0
    %817 = vmatprep.subr.mxu0 0.0
    %818 = vmatpush1.msra.mxu0 0.0
    %819 = vmatprep.subr.mxu0 0.0
    %820 = vmatpush1.msra.mxu0 0.0
    %821 = vmatprep.subr.mxu0 0.0
    %822 = vmatpush1.msra.mxu0 0.0
    %823 = vmatprep.subr.mxu0 0.0
    %824 = vmatpush1.msra.mxu0 0.0
    %825 = vmatprep.subr.mxu0 0.0
    %826 = vmatpush1.msra.mxu0 0.0
    %827 = vmatprep.subr.mxu0 0.0
    %828 = vmatpush1.msra.mxu0 0.0
    %829 = vmatprep.subr.mxu0 0.0
    %830 = vmatpush1.msra.mxu0 0.0
    %831 = vmatprep.subr.mxu0 0.0
    %832 = vmatpush1.msra.mxu0 0.0
    %833 = vmatprep.subr.mxu0 0.0
    %834 = vmatpush1.msra.mxu0 0.0
    %835 = vmatprep.subr.mxu0 0.0
    %836 = vmatpush1.msra.mxu0 0.0
    %837 = vmatprep.subr.mxu0 0.0
    %838 = vmatpush1.msra.mxu0 0.0
    %839 = vmatprep.subr.mxu0 0.0
    %840 = vmatpush1.msra.mxu0 0.0
    %841 = vmatprep.subr.mxu0 0.0
    %842 = vmatpush1.msra.mxu0 0.0
    %843 = vmatprep.subr.mxu0 0.0
    %844 = vmatpush1.msra.mxu0 0.0
    %845 = vmatprep.subr.mxu0 0.0
    %846 = vmatpush1.msra.mxu0 0.0
    %847 = vmatprep.subr.mxu0 0.0
    %848 = vmatpush1.msra.mxu0 0.0
    %849 = vmatprep.subr.mxu0 0.0
    %850 = vmatpush1.msra.mxu0 0.0
    %851 = vmatprep.subr.mxu0 0.0
    %852 = vmatpush1.msra.mxu0 0.0
    %853 = vmatprep.subr.mxu0 0.0
    %854 = vmatpush1.msra.mxu0 0.0
    %855 = vmatprep.subr.mxu0 0.0
    %856 = vmatpush1.msra.mxu0 0.0
    %857 = vmatprep.subr.mxu0 0.0
    %858 = vmatpush1.msra.mxu0 0.0
    %859 = vmatprep.subr.mxu0 0.0
    %860 = vmatpush1.msra.mxu0 0.0
    %861 = vmatprep.subr.mxu0 0.0
    %862 = vmatpush1.msra.mxu0 0.0
    %863 = vmatprep.subr.mxu0 0.0
    %864 = vmatpush1.msra.mxu0 0.0
    %865 = vmatprep.subr.mxu0 0.0
    %866 = vmatpush1.msra.mxu0 0.0
    %867 = vmatprep.subr.mxu0 0.0
    %868 = vmatpush1.msra.mxu0 0.0
    %869 = vmatprep.subr.mxu0 0.0
    %870 = vmatpush1.msra.mxu0 0.0
    %871 = vmatprep.mubr.f32.mxu0 0.0
    %872 = vmatmul.mubr.f32.gmra.mrb[0].mxu0 %v277
    %v873 = vpop.f32.mrb[0].mxu0
    %v874 = vadd.f32 0.0, %v873
    %v875 = vpop.f32.mrb[0].mxu0
    %876 = vmatprep.mubr.f32.mxu0 0.0
    %877 = vmatmul.mubr.f32.gmra.mrb[0].mxu0 %v280
    %v878 = vpop.f32.mrb[0].mxu0
    %v879 = vadd.f32 0.0, %v878
    %v880 = vpop.f32.mrb[0].mxu0
    %881 = vdwg.mxu0
    %vm882 = vcmask 64512
    %883 = vst.msk [vmem:[#allocation8] sm:$0xff] %vm882, %v349
    %884 = vst.msk [vmem:[#allocation8 + $0x8] sm:$0xff] %vm882, %v424
    %885 = vst.msk [vmem:[#allocation8 + $0x10] sm:$0xff] %vm882, %v499
    %886 = vst.msk [vmem:[#allocation8 + $0x18] sm:$0xff] %vm882, %v574
    %887 = vst.msk [vmem:[#allocation8 + $0x20] sm:$0xff] %vm882, %v649
    %888 = vst.msk [vmem:[#allocation8 + $0x28] sm:$0xff] %vm882, %v724
    %889 = vst.msk [vmem:[#allocation8 + $0x30] sm:$0xff] %vm882, %v799
    %890 = vst.msk [vmem:[#allocation8 + $0x38] sm:$0xff] %vm882, %v874
    %899 = vrot.lane.b32.xlu0 %v349, 120
    %v900 = vpop.permute.xlu0 %899
    %901 = vrot.lane.b32.xlu0 %v424, 120
    %v902 = vpop.permute.xlu0 %901
    %903 = vrot.lane.b32.xlu0 %v499, 120
    %v904 = vpop.permute.xlu0 %903
    %905 = vrot.lane.b32.xlu0 %v574, 120
    %v906 = vpop.permute.xlu0 %905
    %907 = vrot.lane.b32.xlu0 %v649, 120
    %v908 = vpop.permute.xlu0 %907
    %909 = vrot.lane.b32.xlu0 %v724, 120
    %v910 = vpop.permute.xlu0 %909
    %911 = vrot.lane.b32.xlu0 %v799, 120
    %v912 = vpop.permute.xlu0 %911
    %913 = vrot.lane.b32.xlu0 %v874, 120
    %v914 = vpop.permute.xlu0 %913
    %923 = vst.msk [vmem:[#allocation9] sm:$0xff] %vm882, %v900
    %924 = vst.msk [vmem:[#allocation9 + $0x8] sm:$0xff] %vm882, %v902
    %925 = vst.msk [vmem:[#allocation9 + $0x10] sm:$0xff] %vm882, %v904
    %926 = vst.msk [vmem:[#allocation9 + $0x18] sm:$0xff] %vm882, %v906
    %927 = vst.msk [vmem:[#allocation9 + $0x20] sm:$0xff] %vm882, %v908
    %928 = vst.msk [vmem:[#allocation9 + $0x28] sm:$0xff] %vm882, %v910
    %929 = vst.msk [vmem:[#allocation9 + $0x30] sm:$0xff] %vm882, %v912
    %930 = vst.msk [vmem:[#allocation9 + $0x38] sm:$0xff] %vm882, %v914
    %931 = vst.msk [vmem:[#allocation11] sm:$0xff] %vm882, %v354
    %932 = vst.msk [vmem:[#allocation11 + $0x8] sm:$0xff] %vm882, %v429
    %933 = vst.msk [vmem:[#allocation11 + $0x10] sm:$0xff] %vm882, %v504
    %934 = vst.msk [vmem:[#allocation11 + $0x18] sm:$0xff] %vm882, %v579
    %935 = vst.msk [vmem:[#allocation11 + $0x20] sm:$0xff] %vm882, %v654
    %936 = vst.msk [vmem:[#allocation11 + $0x28] sm:$0xff] %vm882, %v729
    %937 = vst.msk [vmem:[#allocation11 + $0x30] sm:$0xff] %vm882, %v804
    %938 = vst.msk [vmem:[#allocation11 + $0x38] sm:$0xff] %vm882, %v879
    %947 = vrot.lane.b32.xlu0 %v354, 120
    %v948 = vpop.permute.xlu0 %947
    %949 = vrot.lane.b32.xlu0 %v429, 120
    %v950 = vpop.permute.xlu0 %949
    %951 = vrot.lane.b32.xlu0 %v504, 120
    %v952 = vpop.permute.xlu0 %951
    %953 = vrot.lane.b32.xlu0 %v579, 120
    %v954 = vpop.permute.xlu0 %953
    %955 = vrot.lane.b32.xlu0 %v654, 120
    %v956 = vpop.permute.xlu0 %955
    %957 = vrot.lane.b32.xlu0 %v729, 120
    %v958 = vpop.permute.xlu0 %957
    %959 = vrot.lane.b32.xlu0 %v804, 120
    %v960 = vpop.permute.xlu0 %959
    %961 = vrot.lane.b32.xlu0 %v879, 120
    %v962 = vpop.permute.xlu0 %961
    %971 = vst.msk [vmem:[#allocation12] sm:$0xff] %vm882, %v948
    %972 = vst.msk [vmem:[#allocation12 + $0x8] sm:$0xff] %vm882, %v950
    %973 = vst.msk [vmem:[#allocation12 + $0x10] sm:$0xff] %vm882, %v952
    %974 = vst.msk [vmem:[#allocation12 + $0x18] sm:$0xff] %vm882, %v954
    %975 = vst.msk [vmem:[#allocation12 + $0x20] sm:$0xff] %vm882, %v956
    %976 = vst.msk [vmem:[#allocation12 + $0x28] sm:$0xff] %vm882, %v958
    %977 = vst.msk [vmem:[#allocation12 + $0x30] sm:$0xff] %vm882, %v960
    %978 = vst.msk [vmem:[#allocation12 + $0x38] sm:$0xff] %vm882, %v962
    // Predicated region
    $region26: #{dwt_forward.1} parent=1 // pred_check
      _
    $region27: #{dwt_forward.1} parent=1 // pred_check_branch
      %980 = sbr.rel (0) target = $region29
    $region28: #{dwt_forward.1} parent=1 // pred_region
      %s982 = ssub.s32 1024, 1024
      %983 = vsyncadd [#allocation4], %s982
      %s984 = sshll.u32 [#allocation8], 4
      %s985 = int_to_ptr.vmem [resolvable:$true] %s984
      %990 = dma.vmem_to_hbm [thread:$0]  %s985, 1024, %s3, [#allocation4], 128, 128, 8
    $region29: #{dwt_forward.1} parent=1 // pred_fallthru
      _
    // Predicated region
    $region30: #{dwt_forward.1} parent=1 // pred_check
      _
    $region31: #{dwt_forward.1} parent=1 // pred_check_branch
      %992 = sbr.rel (0) target = $region33
    $region32: #{dwt_forward.1} parent=1 // pred_region
      %s994 = ssub.s32 1024, 1024
      %995 = vsyncadd [#allocation10], %s994
      %s996 = sshll.u32 [#allocation9], 4
      %s997 = int_to_ptr.vmem [resolvable:$true] %s996
      %1002 = dma.vmem_to_hbm [thread:$0]  %s997, 1024, %s4, [#allocation10], 128, 128, 8
    $region33: #{dwt_forward.1} parent=1 // pred_fallthru
      _
    // Predicated region
    $region34: #{dwt_forward.1} parent=1 // pred_check
      _
    $region35: #{dwt_forward.1} parent=1 // pred_check_branch
      %1004 = sbr.rel (0) target = $region37
    $region36: #{dwt_forward.1} parent=1 // pred_region
      %s1006 = ssub.s32 1024, 1024
      %1007 = vsyncadd [#allocation10], %s1006
      %s1008 = sshll.u32 [#allocation11], 4
      %s1009 = int_to_ptr.vmem [resolvable:$true] %s1008
      %1014 = dma.vmem_to_hbm [thread:$0]  %s1009, 1024, %s5, [#allocation10], 128, 128, 8
    $region37: #{dwt_forward.1} parent=1 // pred_fallthru
      _
    // Predicated region
    $region38: #{dwt_forward.1} parent=1 // pred_check
      _
    $region39: #{dwt_forward.1} parent=1 // pred_check_branch
      %1016 = sbr.rel (0) target = $region41
    $region40: #{dwt_forward.1} parent=1 // pred_region
      %s1018 = ssub.s32 1024, 1024
      %1019 = vsyncadd [#allocation13], %s1018
      %s1020 = sshll.u32 [#allocation12], 4
      %s1021 = int_to_ptr.vmem [resolvable:$true] %s1020
      %1026 = dma.vmem_to_hbm [thread:$0]  %s1021, 1024, %s6, [#allocation13], 128, 128, 8
    $region41: #{dwt_forward.1} parent=1 // pred_fallthru
      _
    // Predicated region
    $region42: #{dwt_forward.1} parent=1 // pred_check
      _
    $region43: #{dwt_forward.1} parent=1 // pred_check_branch
      %1028 = sbr.rel (0) target = $region45
    $region44: #{dwt_forward.1} parent=1 // pred_region
      %1029 = dma.done [#allocation4], 1024
    $region45: #{dwt_forward.1} parent=1 // pred_fallthru
      _
    // Predicated region
    $region46: #{dwt_forward.1} parent=1 // pred_check
      _
    $region47: #{dwt_forward.1} parent=1 // pred_check_branch
      %1031 = sbr.rel (0) target = $region49
    $region48: #{dwt_forward.1} parent=1 // pred_region
      %1032 = dma.done [#allocation10], 1024
    $region49: #{dwt_forward.1} parent=1 // pred_fallthru
      _
    // Predicated region
    $region50: #{dwt_forward.1} parent=1 // pred_check
      _
    $region51: #{dwt_forward.1} parent=1 // pred_check_branch
      %1034 = sbr.rel (0) target = $region53
    $region52: #{dwt_forward.1} parent=1 // pred_region
      %1035 = dma.done [#allocation10], 1024
    $region53: #{dwt_forward.1} parent=1 // pred_fallthru
      _
    // Predicated region
    $region54: #{dwt_forward.1} parent=1 // pred_check
      _
    $region55: #{dwt_forward.1} parent=1 // pred_check_branch
      %1037 = sbr.rel (0) target = $region57
    $region56: #{dwt_forward.1} parent=1 // pred_region
      %1038 = dma.done [#allocation13], 1024
    $region57: #{dwt_forward.1} parent=1 // pred_fallthru
      _
    %1039 = vsyncpa [#allocation3], 1
    %1040 = vsyncpa [#allocation6], 1
    %1041 = vsyncpa [#allocation4], 1
    %1042 = vsyncpa [#allocation10], 1
    %1043 = vsyncpa [#allocation13], 1

</llo_original>
